<compile_context>
chip_gen: v6e
topology: v6e:2x2x1
jax: 0.10.0
libtpu: 0.0.40
codegen_flags: <defaults>
</compile_context>

<pallas_src>
import jax
import jax.numpy as jnp
from jax.experimental import pallas as pl
from jax.experimental.pallas import tpu as pltpu

# ------------------------- model configuration (small) ------------------------
TOTAL_LOCATIONS = 500          # module default is 4210; kept small (and deliberately
                               # NOT a multiple of 128 to exercise the padding path)
TIME_SCALE = 48
NUM_ACTS = 4
LOC_DIM, TIM_DIM, ACT_DIM = 64, 8, 4
EMB_DIM = LOC_DIM + TIM_DIM + ACT_DIM      # 76
EMB_PAD = 128                              # lane-dense padded contraction width
HIDDEN = 64
NUM_HEADS = 8
LANE = 128
REWARD_PAD = 128                           # reward head padded to a full lane width
VMEM_BUDGET_BYTES = 14 << 20               # stays under every generation's default
                                           # scoped-VMEM limit (v5e 16 MiB is the floor)


def _round_up(a, b):
    return (a + b - 1) // b * b


TLP = _round_up(TOTAL_LOCATIONS, LANE)     # lane-padded logits width per head
TWO_TLP = 2 * TLP                          # fused mat1|mat2 output width


# ------------------------------- Pallas kernel --------------------------------
def recover_cnn_kernel(x_ref,                    # (TM, EMB_PAD)   zero-padded cols 76..127
                       v_w_ref, v_b_ref,         # self.V          (EMB_PAD, H), (1, H)
                       att_w_ref, att_b_ref,     # folded MHA v_in∘out_proj (H, H), (1, H)
                       big_w_ref, big_b_ref,     # folded attn∘(mat1|mat2) (H, 2*TLP), (1, 2*TLP)
                       rw_w_ref, rw_b_ref,       # reward_layer    (H, 128), (1, 128)
                       pred_ref,                 # (TM, 2*TLP) -> split/sliced outside
                       reward_ref):              # (TM, 128)   -> column 0 sliced outside
    # Value = relu(self.V(x)); the Q/K paths cancel through the length-1 softmax.
    value = jnp.maximum(
        jnp.dot(x_ref[...], v_w_ref[...], preferred_element_type=jnp.float32)
        + v_b_ref[...], 0.0)
    # Dominant matmul: mat1|mat2 with the attention projection folded in offline,
    # so it starts right after V+relu (nothing else on its critical path).
    pred_ref[...] = (jnp.dot(value, big_w_ref[...], preferred_element_type=jnp.float32)
                     + big_b_ref[...]).astype(pred_ref.dtype)
    # attn is only needed for the nonlinear reward branch.
    attn = (jnp.dot(value, att_w_ref[...], preferred_element_type=jnp.float32)
            + att_b_ref[...])
    r = (jnp.dot(jnp.maximum(attn, 0.0), rw_w_ref[...],
                 preferred_element_type=jnp.float32) + rw_b_ref[...])
    # Exact sigmoid (tiny tile; kept exact so the f32 reference check holds).
    reward_ref[...] = (1.0 / (1.0 + jnp.exp(-r))).astype(reward_ref.dtype)


# ---------------------- wrapper-side parameter preparation --------------------
def _pad_cols(w, b, width):
    wp = jnp.zeros((w.shape[0], width), w.dtype).at[:, :w.shape[1]].set(w)
    bp = jnp.zeros((1, width), b.dtype).at[:, :b.shape[1]].set(b)
    return wp, bp


def _prepare_kernel_params(params):
    H = HIDDEN
    # V weight: pad the contraction dim 76 -> 128 with zero rows (exact).
    v_w = jnp.zeros((EMB_PAD, H), jnp.float32).at[:EMB_DIM, :].set(params["v_w_t"])
    v_b = params["v_b"]

    # MHA in_proj_weight is (3H, H); only the value slice [2H:3H] reaches the
    # output when seq_len == 1.  Fold it with out_proj (pure linear composition).
    vin_w_t = params["in_proj_w"][2 * H:3 * H, :].T          # (H, H)
    vin_b = params["in_proj_b"][2 * H:3 * H].reshape(1, H)
    att_w = vin_w_t @ params["out_w_t"]                       # (H, H)
    att_b = vin_b @ params["out_w_t"] + params["out_b"]       # (1, H)

    # mat1 | mat2, lane-padded and concatenated, with attn folded in:
    #   pred = attn @ M + mb = value @ (att_w @ M) + (att_b @ M + mb)
    m1_w, m1_b = _pad_cols(params["m1_w_t"], params["m1_b"], TLP)
    m2_w, m2_b = _pad_cols(params["m2_w_t"], params["m2_b"], TLP)
    m_w = jnp.concatenate([m1_w, m2_w], axis=1)               # (H, 2*TLP)
    m_b = jnp.concatenate([m1_b, m2_b], axis=1)               # (1, 2*TLP)
    big_w = att_w @ m_w                                        # (H, 2*TLP)
    big_b = att_b @ m_w + m_b                                  # (1, 2*TLP)

    rw_w, rw_b = _pad_cols(params["rw_w_t"], params["rw_b"], REWARD_PAD)
    return {"v_w": v_w, "v_b": v_b,
            "att_w": att_w, "att_b": att_b,
            "big_w": big_w, "big_b": big_b,
            "rw_w": rw_w, "rw_b": rw_b}


# ------------------------------ token-tile sizing ------------------------------
def _choose_token_tile(n_pad8, token_tile_cap):
    out_w = TWO_TLP + REWARD_PAD
    # Double-buffered per-token bytes: x tile in + (pred, reward) tiles out, f32.
    per_token = 4 * (2 * EMB_PAD + 2 * out_w)
    # Weights/biases, conservatively counted as double-buffered.
    weight_bytes = 4 * 2 * (EMB_PAD * HIDDEN + HIDDEN * HIDDEN
                            + HIDDEN * out_w + out_w + 2 * HIDDEN)
    tm_cap = max(8, (VMEM_BUDGET_BYTES - weight_bytes) // per_token // 8 * 8)
    tm = min(token_tile_cap, n_pad8, tm_cap)
    # v7x: guarantee >=2 grid steps (so ("parallel",) uses both TensorCores)
    # once there is enough work for two >=256-token tiles; no-op on v5e/v6e.
    if n_pad8 // tm < 2 and n_pad8 >= 512:
        tm = _round_up(pl.cdiv(n_pad8, 2), 8)
    # MXU-friendly M tiles when large enough.
    if tm >= 128:
        tm = (tm // 128) * 128
    return max(tm, 8)


# ----------------------------------- wrapper -----------------------------------
def recover_cnn_forward(params, x_l, x_t, x_a, *, token_tile_cap=1024):
    # Embedding gathers + concat are glue (plain JAX); dense hot path is Pallas.
    # TODO(synk): fusing the gather into the kernel via scalar-prefetched indices
    # only pays off at large N; left to XLA's fused gather here.
    lemb = params["loc_table"][x_l.reshape(-1)]
    temb = params["tim_table"][x_t.reshape(-1)]
    aemb = params["act_table"][x_a.reshape(-1)]
    x = jnp.concatenate([lemb, temb, aemb], axis=-1).astype(jnp.float32)  # (N, 76)
    n = x.shape[0]

    kp = _prepare_kernel_params(params)

    n_pad8 = _round_up(max(n, 1), 8)
    tm = _choose_token_tile(n_pad8, token_tile_cap)
    n_pad = _round_up(n_pad8, tm)
    grid = (n_pad // tm,)

    # Lane-dense, token-padded input tile (cols 76..127 and rows n..n_pad are zero).
    xp = jnp.zeros((n_pad, EMB_PAD), jnp.float32).at[:n, :EMB_DIM].set(x)

    const = lambda i: (0, 0)
    row = lambda i: (i, 0)

    out_w = TWO_TLP + REWARD_PAD
    cost = pl.CostEstimate(
        flops=2 * n_pad * (EMB_PAD * HIDDEN + HIDDEN * TWO_TLP
                           + HIDDEN * HIDDEN + HIDDEN * REWARD_PAD),
        transcendentals=n_pad * REWARD_PAD,
        bytes_accessed=4 * (n_pad * EMB_PAD
                            + EMB_PAD * HIDDEN + HIDDEN * HIDDEN
                            + HIDDEN * TWO_TLP + HIDDEN * REWARD_PAD
                            + 2 * HIDDEN + TWO_TLP + REWARD_PAD
                            + n_pad * out_w))

    grid_spec = pltpu.PrefetchScalarGridSpec(
        num_scalar_prefetch=0,
        grid=grid,
        in_specs=[
            pl.BlockSpec((tm, EMB_PAD),        row),    # x (token tile)
            pl.BlockSpec((EMB_PAD, HIDDEN),    const),  # V weight (row-padded)
            pl.BlockSpec((1, HIDDEN),          const),  # V bias
            pl.BlockSpec((HIDDEN, HIDDEN),     const),  # folded attention weight
            pl.BlockSpec((1, HIDDEN),          const),  # folded attention bias
            pl.BlockSpec((HIDDEN, TWO_TLP),    const),  # folded attn∘(mat1|mat2) weight
            pl.BlockSpec((1, TWO_TLP),         const),  # folded attn∘(mat1|mat2) bias
            pl.BlockSpec((HIDDEN, REWARD_PAD), const),  # reward weight (padded)
            pl.BlockSpec((1, REWARD_PAD),      const),  # reward bias (padded)
        ],
        out_specs=(
            pl.BlockSpec((tm, TWO_TLP),    row),        # fused pred1|pred2 logits
            pl.BlockSpec((tm, REWARD_PAD), row),        # reward (col 0 meaningful)
        ),
    )

    pred_p, reward_p = pl.pallas_call(
        recover_cnn_kernel,
        out_shape=(jax.ShapeDtypeStruct((n_pad, TWO_TLP), jnp.float32),
                   jax.ShapeDtypeStruct((n_pad, REWARD_PAD), jnp.float32)),
        grid_spec=grid_spec,
        compiler_params=pltpu.CompilerParams(dimension_semantics=("parallel",)),
        cost_estimate=cost,
    )(xp, kp["v_w"], kp["v_b"], kp["att_w"], kp["att_b"],
      kp["big_w"], kp["big_b"], kp["rw_w"], kp["rw_b"])

    # PyTorch shapes: reward (1, N, 1); pred_mat1/pred_mat2 (N, total_locations).
    reward = reward_p[:n, :1].reshape(1, n, 1)
    pred1 = pred_p[:n, :TOTAL_LOCATIONS]
    pred2 = pred_p[:n, TLP:TLP + TOTAL_LOCATIONS]
    return reward, pred1, pred2


# ------------------------- deterministic parameter init -----------------------
def init_params(key):
    # Recover_CNN.init_params(): every parameter ~ Uniform(-0.05, 0.05).
    def u(k, shape):
        return jax.random.uniform(k, shape, jnp.float32, minval=-0.05, maxval=0.05)

    ks = jax.random.split(key, 19)
    H = HIDDEN
    return {
        # embedding tables
        "loc_table": u(ks[0], (TOTAL_LOCATIONS, LOC_DIM)),
        "tim_table": u(ks[1], (TIME_SCALE, TIM_DIM)),
        "act_table": u(ks[2], (NUM_ACTS, ACT_DIM)),
        # self.Q / self.K / self.V (transposed (in, out)); Q/K cancel from the
        # output (length-1 softmax) but are kept for the full reference check.
        "q_w_t": u(ks[3], (EMB_DIM, H)), "q_b": u(ks[4], (1, H)),
        "k_w_t": u(ks[5], (EMB_DIM, H)), "k_b": u(ks[6], (1, H)),
        "v_w_t": u(ks[7], (EMB_DIM, H)), "v_b": u(ks[8], (1, H)),
        # nn.MultiheadAttention(hidden=64, heads=8)
        "in_proj_w": u(ks[9], (3 * H, H)),
        "in_proj_b": u(ks[10], (3 * H,)),
        "out_w_t": u(ks[11], (H, H)),
        "out_b":   u(ks[12], (1, H)),
        # self.mat1 / self.mat2: hidden -> total_locations
        "m1_w_t": u(ks[13], (H, TOTAL_LOCATIONS)), "m1_b": u(ks[14], (1, TOTAL_LOCATIONS)),
        "m2_w_t": u(ks[15], (H, TOTAL_LOCATIONS)), "m2_b": u(ks[16], (1, TOTAL_LOCATIONS)),
        # self.reward_layer = Linear(hidden, 1) + Sigmoid
        "rw_w_t": u(ks[17], (H, 1)), "rw_b": u(ks[18], (1, 1)),
    }


# ----------------------------- pure-JAX reference ------------------------------
def reference_forward(params, x_l, x_t, x_a):
    """Full forward including Q/K and the multi-head softmax (length-1 key)."""
    x = jnp.concatenate([params["loc_table"][x_l.reshape(-1)],
                         params["tim_table"][x_t.reshape(-1)],
                         params["act_table"][x_a.reshape(-1)]], axis=-1)
    n = x.shape[0]
    H, NH = HIDDEN, NUM_HEADS
    hd = H // NH
    q = jax.nn.relu(x @ params["q_w_t"] + params["q_b"])
    k = jax.nn.relu(x @ params["k_w_t"] + params["k_b"])
    v = jax.nn.relu(x @ params["v_w_t"] + params["v_b"])
    Wq = params["in_proj_w"][:H].T;        bq = params["in_proj_b"][:H]
    Wk = params["in_proj_w"][H:2 * H].T;   bk = params["in_proj_b"][H:2 * H]
    Wv = params["in_proj_w"][2 * H:].T;    bv = params["in_proj_b"][2 * H:]
    qp = (q @ Wq + bq).reshape(n, NH, hd)
    kp = (k @ Wk + bk).reshape(n, NH, hd)
    vp = (v @ Wv + bv).reshape(n, NH, hd)
    scores = jnp.sum(qp * kp, axis=-1, keepdims=True) / jnp.sqrt(jnp.float32(hd))
    w = jax.nn.softmax(scores, axis=-1)          # key axis has length 1 -> all ones
    attn = (w * vp).reshape(n, H) @ params["out_w_t"] + params["out_b"]
    pred1 = attn @ params["m1_w_t"] + params["m1_b"]
    pred2 = attn @ params["m2_w_t"] + params["m2_b"]
    reward = jax.nn.sigmoid(jax.nn.relu(attn) @ params["rw_w_t"] + params["rw_b"])
    return reward.reshape(1, n, 1), pred1, pred2


if __name__ == "__main__":
    key = jax.random.PRNGKey(0)
    pkey, k1, k2, k3 = jax.random.split(key, 4)
    params = init_params(pkey)

    B, S = 2, 8                       # batch=2, seq=8 -> N = 16 tokens
    x_l = jax.random.randint(k1, (B, S), 0, TOTAL_LOCATIONS, dtype=jnp.int32)
    x_t = jax.random.randint(k2, (B, S), 0, TIME_SCALE, dtype=jnp.int32)
    x_a = jax.random.randint(k3, (B, S), 0, NUM_ACTS, dtype=jnp.int32)

    reward, pred1, pred2 = recover_cnn_forward(params, x_l, x_t, x_a)
    jax.block_until_ready((reward, pred1, pred2))

    r_ref, p1_ref, p2_ref = reference_forward(params, x_l, x_t, x_a)
    N = B * S
    assert reward.shape == (1, N, 1)
    assert pred1.shape == (N, TOTAL_LOCATIONS)
    assert pred2.shape == (N, TOTAL_LOCATIONS)
    assert jnp.allclose(reward, r_ref, atol=2e-5, rtol=1e-4)
    assert jnp.allclose(pred1, p1_ref, atol=2e-5, rtol=1e-4)
    assert jnp.allclose(pred2, p2_ref, atol=2e-5, rtol=1e-4)
    print("KERNEL_OK")
</pallas_src>

<mosaic_0001>
module attributes {stable_mosaic.version = 11 : i64} {
  func.func @recover_cnn_kernel(%arg0: i32, %arg1: memref<16x128xf32, #tpu.memory_space<vmem>>, %arg2: memref<128x64xf32, #tpu.memory_space<vmem>>, %arg3: memref<1x64xf32, #tpu.memory_space<vmem>>, %arg4: memref<64x64xf32, #tpu.memory_space<vmem>>, %arg5: memref<1x64xf32, #tpu.memory_space<vmem>>, %arg6: memref<64x1024xf32, #tpu.memory_space<vmem>>, %arg7: memref<1x1024xf32, #tpu.memory_space<vmem>>, %arg8: memref<64x128xf32, #tpu.memory_space<vmem>>, %arg9: memref<1x128xf32, #tpu.memory_space<vmem>>, %arg10: memref<16x1024xf32, #tpu.memory_space<vmem>>, %arg11: memref<16x128xf32, #tpu.memory_space<vmem>>) attributes {dimension_semantics = [#tpu.dimension_semantics<parallel>], iteration_bounds = array<i64: 1>, scalar_prefetch = 0 : i64, scratch_operands = 0 : i64, tpu.core_type = #tpu.core_type<tc>, window_params = [{transform_indices = @transform_0, window_bounds = array<i64: 16, 128>}, {pipeline_mode = #tpu.pipeline_mode<synchronous>, transform_indices = @transform_1, window_bounds = array<i64: 128, 64>}, {pipeline_mode = #tpu.pipeline_mode<synchronous>, transform_indices = @transform_2, window_bounds = array<i64: 1, 64>}, {pipeline_mode = #tpu.pipeline_mode<synchronous>, transform_indices = @transform_3, window_bounds = array<i64: 64, 64>}, {pipeline_mode = #tpu.pipeline_mode<synchronous>, transform_indices = @transform_4, window_bounds = array<i64: 1, 64>}, {pipeline_mode = #tpu.pipeline_mode<synchronous>, transform_indices = @transform_5, window_bounds = array<i64: 64, 1024>}, {pipeline_mode = #tpu.pipeline_mode<synchronous>, transform_indices = @transform_6, window_bounds = array<i64: 1, 1024>}, {pipeline_mode = #tpu.pipeline_mode<synchronous>, transform_indices = @transform_7, window_bounds = array<i64: 64, 128>}, {pipeline_mode = #tpu.pipeline_mode<synchronous>, transform_indices = @transform_8, window_bounds = array<i64: 1, 128>}, {transform_indices = @transform_9, window_bounds = array<i64: 16, 1024>}, {transform_indices = @transform_10, window_bounds = array<i64: 16, 128>}]} {
    %c0 = arith.constant 0 : index
    %c0_0 = arith.constant 0 : index
    %0 = vector.load %arg1[%c0, %c0_0] : memref<16x128xf32, #tpu.memory_space<vmem>>, vector<16x128xf32>
    %c0_1 = arith.constant 0 : index
    %c0_2 = arith.constant 0 : index
    %1 = vector.load %arg2[%c0_1, %c0_2] : memref<128x64xf32, #tpu.memory_space<vmem>>, vector<128x64xf32>
    %cst = arith.constant dense<0.000000e+00> : vector<16x64xf32>
    %2 = tpu.matmul %0, %1, %cst {dimension_numbers = #tpu.dot_dimension_numbers<[1], [0], [0], [1], [0, 0, 1, 1], [], []>} : vector<16x128xf32>, vector<128x64xf32>, vector<16x64xf32> -> vector<16x64xf32>
    %c0_3 = arith.constant 0 : index
    %c0_4 = arith.constant 0 : index
    %3 = vector.load %arg3[%c0_3, %c0_4] : memref<1x64xf32, #tpu.memory_space<vmem>>, vector<1x64xf32>
    %4 = vector.broadcast %3 : vector<1x64xf32> to vector<16x64xf32>
    %5 = arith.addf %2, %4 : vector<16x64xf32>
    %cst_5 = arith.constant 0.000000e+00 : f32
    %6 = vector.broadcast %cst_5 : f32 to vector<16x64xf32>
    %7 = arith.maximumf %5, %6 : vector<16x64xf32>
    %c0_6 = arith.constant 0 : index
    %c0_7 = arith.constant 0 : index
    %8 = vector.load %arg6[%c0_6, %c0_7] : memref<64x1024xf32, #tpu.memory_space<vmem>>, vector<64x1024xf32>
    %cst_8 = arith.constant dense<0.000000e+00> : vector<16x1024xf32>
    %9 = tpu.matmul %7, %8, %cst_8 {dimension_numbers = #tpu.dot_dimension_numbers<[1], [0], [0], [1], [0, 0, 1, 1], [], []>} : vector<16x64xf32>, vector<64x1024xf32>, vector<16x1024xf32> -> vector<16x1024xf32>
    %c0_9 = arith.constant 0 : index
    %c0_10 = arith.constant 0 : index
    %10 = vector.load %arg7[%c0_9, %c0_10] : memref<1x1024xf32, #tpu.memory_space<vmem>>, vector<1x1024xf32>
    %11 = vector.broadcast %10 : vector<1x1024xf32> to vector<16x1024xf32>
    %12 = arith.addf %9, %11 : vector<16x1024xf32>
    %c0_11 = arith.constant 0 : index
    %c0_12 = arith.constant 0 : index
    %13 = vector.load %arg10[%c0_11, %c0_12] : memref<16x1024xf32, #tpu.memory_space<vmem>>, vector<16x1024xf32>
    tpu.vector_store %arg10[%c0_11, %c0_12], %12 {strides = array<i32>} : memref<16x1024xf32, #tpu.memory_space<vmem>>, vector<16x1024xf32>,
    %c0_13 = arith.constant 0 : index
    %c0_14 = arith.constant 0 : index
    %14 = vector.load %arg4[%c0_13, %c0_14] : memref<64x64xf32, #tpu.memory_space<vmem>>, vector<64x64xf32>
    %cst_15 = arith.constant dense<0.000000e+00> : vector<16x64xf32>
    %15 = tpu.matmul %7, %14, %cst_15 {dimension_numbers = #tpu.dot_dimension_numbers<[1], [0], [0], [1], [0, 0, 1, 1], [], []>} : vector<16x64xf32>, vector<64x64xf32>, vector<16x64xf32> -> vector<16x64xf32>
    %c0_16 = arith.constant 0 : index
    %c0_17 = arith.constant 0 : index
    %16 = vector.load %arg5[%c0_16, %c0_17] : memref<1x64xf32, #tpu.memory_space<vmem>>, vector<1x64xf32>
    %17 = vector.broadcast %16 : vector<1x64xf32> to vector<16x64xf32>
    %18 = arith.addf %15, %17 : vector<16x64xf32>
    %cst_18 = arith.constant 0.000000e+00 : f32
    %19 = vector.broadcast %cst_18 : f32 to vector<16x64xf32>
    %20 = arith.maximumf %18, %19 : vector<16x64xf32>
    %c0_19 = arith.constant 0 : index
    %c0_20 = arith.constant 0 : index
    %21 = vector.load %arg8[%c0_19, %c0_20] : memref<64x128xf32, #tpu.memory_space<vmem>>, vector<64x128xf32>
    %cst_21 = arith.constant dense<0.000000e+00> : vector<16x128xf32>
    %22 = tpu.matmul %20, %21, %cst_21 {dimension_numbers = #tpu.dot_dimension_numbers<[1], [0], [0], [1], [0, 0, 1, 1], [], []>} : vector<16x64xf32>, vector<64x128xf32>, vector<16x128xf32> -> vector<16x128xf32>
    %c0_22 = arith.constant 0 : index
    %c0_23 = arith.constant 0 : index
    %23 = vector.load %arg9[%c0_22, %c0_23] : memref<1x128xf32, #tpu.memory_space<vmem>>, vector<1x128xf32>
    %24 = vector.broadcast %23 : vector<1x128xf32> to vector<16x128xf32>
    %25 = arith.addf %22, %24 : vector<16x128xf32>
    %cst_24 = arith.constant 0.000000e+00 : f32
    %26 = vector.broadcast %cst_24 : f32 to vector<16x128xf32>
    %27 = arith.subf %26, %25 : vector<16x128xf32>
    %28 = math.exp %27 : vector<16x128xf32>
    %cst_25 = arith.constant 1.000000e+00 : f32
    %29 = vector.broadcast %cst_25 : f32 to vector<16x128xf32>
    %30 = arith.addf %29, %28 : vector<16x128xf32>
    %cst_26 = arith.constant 1.000000e+00 : f32
    %31 = vector.broadcast %cst_26 : f32 to vector<16x128xf32>
    %32 = arith.divf %31, %30 : vector<16x128xf32>
    %c0_27 = arith.constant 0 : index
    %c0_28 = arith.constant 0 : index
    %33 = vector.load %arg11[%c0_27, %c0_28] : memref<16x128xf32, #tpu.memory_space<vmem>>, vector<16x128xf32>
    tpu.vector_store %arg11[%c0_27, %c0_28], %32 {strides = array<i32>} : memref<16x128xf32, #tpu.memory_space<vmem>>, vector<16x128xf32>,
    return
  }
  func.func @transform_0(%arg0: i32) -> (i32, i32) {
    %c0_i32 = arith.constant 0 : i32
    %c0_i32_0 = arith.constant 0 : i32
    return %arg0, %c0_i32 : i32, i32
  }
  func.func @transform_1(%arg0: i32) -> (i32, i32) {
    %c0_i32 = arith.constant 0 : i32
    %c0_i32_0 = arith.constant 0 : i32
    %c0_i32_1 = arith.constant 0 : i32
    return %c0_i32, %c0_i32_0 : i32, i32
  }
  func.func @transform_2(%arg0: i32) -> (i32, i32) {
    %c0_i32 = arith.constant 0 : i32
    %c0_i32_0 = arith.constant 0 : i32
    %c0_i32_1 = arith.constant 0 : i32
    return %c0_i32, %c0_i32_0 : i32, i32
  }
  func.func @transform_3(%arg0: i32) -> (i32, i32) {
    %c0_i32 = arith.constant 0 : i32
    %c0_i32_0 = arith.constant 0 : i32
    %c0_i32_1 = arith.constant 0 : i32
    return %c0_i32, %c0_i32_0 : i32, i32
  }
  func.func @transform_4(%arg0: i32) -> (i32, i32) {
    %c0_i32 = arith.constant 0 : i32
    %c0_i32_0 = arith.constant 0 : i32
    %c0_i32_1 = arith.constant 0 : i32
    return %c0_i32, %c0_i32_0 : i32, i32
  }
  func.func @transform_5(%arg0: i32) -> (i32, i32) {
    %c0_i32 = arith.constant 0 : i32
    %c0_i32_0 = arith.constant 0 : i32
    %c0_i32_1 = arith.constant 0 : i32
    return %c0_i32, %c0_i32_0 : i32, i32
  }
  func.func @transform_6(%arg0: i32) -> (i32, i32) {
    %c0_i32 = arith.constant 0 : i32
    %c0_i32_0 = arith.constant 0 : i32
    %c0_i32_1 = arith.constant 0 : i32
    return %c0_i32, %c0_i32_0 : i32, i32
  }
  func.func @transform_7(%arg0: i32) -> (i32, i32) {
    %c0_i32 = arith.constant 0 : i32
    %c0_i32_0 = arith.constant 0 : i32
    %c0_i32_1 = arith.constant 0 : i32
    return %c0_i32, %c0_i32_0 : i32, i32
  }
  func.func @transform_8(%arg0: i32) -> (i32, i32) {
    %c0_i32 = arith.constant 0 : i32
    %c0_i32_0 = arith.constant 0 : i32
    %c0_i32_1 = arith.constant 0 : i32
    return %c0_i32, %c0_i32_0 : i32, i32
  }
  func.func @transform_9(%arg0: i32) -> (i32, i32) {
    %c0_i32 = arith.constant 0 : i32
    %c0_i32_0 = arith.constant 0 : i32
    return %arg0, %c0_i32 : i32, i32
  }
  func.func @transform_10(%arg0: i32) -> (i32, i32) {
    %c0_i32 = arith.constant 0 : i32
    %c0_i32_0 = arith.constant 0 : i32
    return %arg0, %c0_i32 : i32, i32
  }
}

</mosaic_0001>

<llo_original>
// kernel: tpu_custom_call.1
$region0: #{tpu_custom_call.1}
  #allocation0 [shape = 'u32[]', space=smem, size = 0x4, offset = 0x4, fixed_abs, tag = 'smem constant byte address 0x4 - core index']
  #allocation1 [shape = 'u32[144,128]{1,0:T(1,128)}', space=vmem, size = 0x12000, scoped, tag = 'internal scratch']
  %s0 = inlined_call_operand.vmem [shape: f32[16,128], index: 0, kind: input, shape index: {}]
  %s1 = inlined_call_operand.vmem [shape: f32[128,64], index: 1, kind: input, shape index: {}]
  %s2 = inlined_call_operand.vmem [shape: f32[1,64], index: 2, kind: input, shape index: {}]
  %s3 = inlined_call_operand.vmem [shape: f32[64,64], index: 3, kind: input, shape index: {}]
  %s4 = inlined_call_operand.vmem [shape: f32[1,64], index: 4, kind: input, shape index: {}]
  %s5 = inlined_call_operand.hbm [shape: f32[64,1024], index: 5, kind: input, shape index: {}]
  %s6 = inlined_call_operand.vmem [shape: f32[1,1024], index: 6, kind: input, shape index: {}]
  %s7 = inlined_call_operand.vmem [shape: f32[64,128], index: 7, kind: input, shape index: {}]
  %s8 = inlined_call_operand.vmem [shape: f32[1,128], index: 8, kind: input, shape index: {}]
  %s9 = inlined_call_operand.hbm [shape: f32[16,1024], index: 9, kind: output, shape index: {0}]
  %s10 = inlined_call_operand.hbm [shape: f32[16,128], index: 10, kind: output, shape index: {1}]
  %11 = xla_tuple %s9, %s10
  %s12 = sld [smem:[#allocation0]]
  $region58: #{tpu_custom_call.1} parent=0
    _
  %s14 = ssub.s32 1, %s12
  %s15 = scalar_select 0, %s14, %s12
  $region1: #{tpu_custom_call.1} parent=0
    #allocation2 [shape = 'u8[262144]{0}', space=vmem, size = 0x40000, scoped, tag = 'input window, operand 5, single buffered']
    #allocation3 [shape = 's32[1]{0}', space=sflag, size = 0x4, scoped, tag = 'scoped memory for tpu_custom_call.1']
    #allocation4 [shape = 's32[1]{0}', space=sflag, size = 0x4, scoped, tag = 'scoped memory for tpu_custom_call.1']
    #allocation5 [shape = 'u8[65536]{0}', space=vmem, size = 0x10000, scoped, tag = 'output window, operand 0, single buffered']
    #allocation6 [shape = 'u8[8192]{0}', space=vmem, size = 0x2000, scoped, tag = 'output window, operand 1, single buffered']
    #allocation7 [shape = 's32[1]{0}', space=sflag, size = 0x4, scoped, tag = 'scoped memory for tpu_custom_call.1']
    %16 = vsyncpa [#allocation3], 0
    %17 = vsyncpa [#allocation4], 0
    %18 = vsyncpa [#allocation7], 0
    // Predicated region
    $region2: #{tpu_custom_call.1} parent=1 // pred_check
      _
    $region3: #{tpu_custom_call.1} parent=1 // pred_check_branch
      %20 = sbr.rel (0) target = $region5
    $region4: #{tpu_custom_call.1} parent=1 // pred_region
      _
    $region5: #{tpu_custom_call.1} parent=1 // pred_fallthru
      _
    // Predicated region
    $region6: #{tpu_custom_call.1} parent=1 // pred_check
      _
    $region7: #{tpu_custom_call.1} parent=1 // pred_check_branch
      %22 = sbr.rel (0) target = $region9
    $region8: #{tpu_custom_call.1} parent=1 // pred_region
      _
    $region9: #{tpu_custom_call.1} parent=1 // pred_fallthru
      _
    // Predicated region
    $region10: #{tpu_custom_call.1} parent=1 // pred_check
      _
    $region11: #{tpu_custom_call.1} parent=1 // pred_check_branch
      %24 = sbr.rel (0) target = $region13
    $region12: #{tpu_custom_call.1} parent=1 // pred_region
      _
    $region13: #{tpu_custom_call.1} parent=1 // pred_fallthru
      _
    // Predicated region
    $region14: #{tpu_custom_call.1} parent=1 // pred_check
      _
    $region15: #{tpu_custom_call.1} parent=1 // pred_check_branch
      %26 = sbr.rel (0) target = $region17
    $region16: #{tpu_custom_call.1} parent=1 // pred_region
      _
    $region17: #{tpu_custom_call.1} parent=1 // pred_fallthru
      _
    // Predicated region
    $region18: #{tpu_custom_call.1} parent=1 // pred_check
      _
    $region19: #{tpu_custom_call.1} parent=1 // pred_check_branch
      %28 = sbr.rel (0) target = $region21
    $region20: #{tpu_custom_call.1} parent=1 // pred_region
      _
    $region21: #{tpu_custom_call.1} parent=1 // pred_fallthru
      _
    // Predicated region
    $region22: #{tpu_custom_call.1} parent=1 // pred_check
      _
    $region23: #{tpu_custom_call.1} parent=1 // pred_check_branch
      %30 = sbr.rel (0) target = $region25
    $region24: #{tpu_custom_call.1} parent=1 // pred_region
      %s32 = ssub.s32 8192, 8192
      %33 = vsyncadd [#allocation3], %s32
      %s34 = sshll.u32 [#allocation2], 4
      %s35 = int_to_ptr.vmem [resolvable:$true] %s34
      %40 = dma.hbm_to_vmem [thread:$0]  %s5, 8192, %s35, [#allocation3], 1024, 1024, 64
    $region25: #{tpu_custom_call.1} parent=1 // pred_fallthru
      _
    // Predicated region
    $region26: #{tpu_custom_call.1} parent=1 // pred_check
      _
    $region27: #{tpu_custom_call.1} parent=1 // pred_check_branch
      %42 = sbr.rel (0) target = $region29
    $region28: #{tpu_custom_call.1} parent=1 // pred_region
      _
    $region29: #{tpu_custom_call.1} parent=1 // pred_fallthru
      _
    // Predicated region
    $region30: #{tpu_custom_call.1} parent=1 // pred_check
      _
    $region31: #{tpu_custom_call.1} parent=1 // pred_check_branch
      %44 = sbr.rel (0) target = $region33
    $region32: #{tpu_custom_call.1} parent=1 // pred_region
      _
    $region33: #{tpu_custom_call.1} parent=1 // pred_fallthru
      _
    // Predicated region
    $region34: #{tpu_custom_call.1} parent=1 // pred_check
      _
    $region35: #{tpu_custom_call.1} parent=1 // pred_check_branch
      %46 = sbr.rel (0) target = $region37
    $region36: #{tpu_custom_call.1} parent=1 // pred_region
      _
    $region37: #{tpu_custom_call.1} parent=1 // pred_fallthru
      _
    // Predicated region
    $region38: #{tpu_custom_call.1} parent=1 // pred_check
      _
    $region39: #{tpu_custom_call.1} parent=1 // pred_check_branch
      %48 = sbr.rel (0) target = $region41
    $region40: #{tpu_custom_call.1} parent=1 // pred_region
      %49 = dma.done [#allocation3], 8192
    $region41: #{tpu_custom_call.1} parent=1 // pred_fallthru
      _
    %v50 = vld [vmem:[%s0] sm:$0xff]
    %v51 = vld [vmem:[%s0 + $0x8] sm:$0xff]
    %v52 = vld [vmem:[%s1] sm:$0xff]
    %v53 = vld [vmem:[%s1 + $0x8] sm:$0xff]
    %v54 = vld [vmem:[%s1 + $0x10] sm:$0xff]
    %v55 = vld [vmem:[%s1 + $0x18] sm:$0xff]
    %v56 = vld [vmem:[%s1 + $0x20] sm:$0xff]
    %v57 = vld [vmem:[%s1 + $0x28] sm:$0xff]
    %v58 = vld [vmem:[%s1 + $0x30] sm:$0xff]
    %v59 = vld [vmem:[%s1 + $0x38] sm:$0xff]
    %v60 = vld [vmem:[%s1 + $0x40] sm:$0xff]
    %v61 = vld [vmem:[%s1 + $0x48] sm:$0xff]
    %v62 = vld [vmem:[%s1 + $0x50] sm:$0xff]
    %v63 = vld [vmem:[%s1 + $0x58] sm:$0xff]
    %v64 = vld [vmem:[%s1 + $0x60] sm:$0xff]
    %v65 = vld [vmem:[%s1 + $0x68] sm:$0xff]
    %v66 = vld [vmem:[%s1 + $0x70] sm:$0xff]
    %v67 = vld [vmem:[%s1 + $0x78] sm:$0xff]
    %v68 = vld [vmem:[%s2] sm:$0x1]
    %v70 = vlaneseq
    %v71 = vshrl.u32 %v70, 7
    %v72 = vsub.s32 0, %v71
    %v73 = vrot.slane %v68, %v72
    %75 = vmatprep.subr.mxu0 0.0
    %76 = vmatpush1.msra.mxu0 %v67
    %77 = vmatprep.subr.mxu0 0.0
    %78 = vmatpush1.msra.mxu0 %v66
    %79 = vmatprep.subr.mxu0 0.0
    %80 = vmatpush1.msra.mxu0 %v65
    %81 = vmatprep.subr.mxu0 0.0
    %82 = vmatpush1.msra.mxu0 %v64
    %83 = vmatprep.subr.mxu0 0.0
    %84 = vmatpush1.msra.mxu0 %v63
    %85 = vmatprep.subr.mxu0 0.0
    %86 = vmatpush1.msra.mxu0 %v62
    %87 = vmatprep.subr.mxu0 0.0
    %88 = vmatpush1.msra.mxu0 %v61
    %89 = vmatprep.subr.mxu0 0.0
    %90 = vmatpush1.msra.mxu0 %v60
    %91 = vmatprep.subr.mxu0 0.0
    %92 = vmatpush1.msra.mxu0 %v59
    %93 = vmatprep.subr.mxu0 0.0
    %94 = vmatpush1.msra.mxu0 %v58
    %95 = vmatprep.subr.mxu0 0.0
    %96 = vmatpush1.msra.mxu0 %v57
    %97 = vmatprep.subr.mxu0 0.0
    %98 = vmatpush1.msra.mxu0 %v56
    %99 = vmatprep.subr.mxu0 0.0
    %100 = vmatpush1.msra.mxu0 %v55
    %101 = vmatprep.subr.mxu0 0.0
    %102 = vmatpush1.msra.mxu0 %v54
    %103 = vmatprep.subr.mxu0 0.0
    %104 = vmatpush1.msra.mxu0 %v53
    %105 = vmatprep.subr.mxu0 0.0
    %106 = vmatpush1.msra.mxu0 %v52
    %107 = vmatprep.subr.mxu0 0.0
    %108 = vmatpush2.msra.mxu0 0.0
    %109 = vmatprep.subr.mxu0 0.0
    %110 = vmatpush2.msra.mxu0 0.0
    %111 = vmatprep.subr.mxu0 0.0
    %112 = vmatpush2.msra.mxu0 0.0
    %113 = vmatprep.subr.mxu0 0.0
    %114 = vmatpush2.msra.mxu0 0.0
    %115 = vmatprep.subr.mxu0 0.0
    %116 = vmatpush2.msra.mxu0 0.0
    %117 = vmatprep.subr.mxu0 0.0
    %118 = vmatpush2.msra.mxu0 0.0
    %119 = vmatprep.subr.mxu0 0.0
    %120 = vmatpush2.msra.mxu0 0.0
    %121 = vmatprep.subr.mxu0 0.0
    %122 = vmatpush2.msra.mxu0 0.0
    %123 = vmatprep.subr.mxu0 0.0
    %124 = vmatpush2.msra.mxu0 0.0
    %125 = vmatprep.subr.mxu0 0.0
    %126 = vmatpush2.msra.mxu0 0.0
    %127 = vmatprep.subr.mxu0 0.0
    %128 = vmatpush2.msra.mxu0 0.0
    %129 = vmatprep.subr.mxu0 0.0
    %130 = vmatpush2.msra.mxu0 0.0
    %131 = vmatprep.subr.mxu0 0.0
    %132 = vmatpush2.msra.mxu0 0.0
    %133 = vmatprep.subr.mxu0 0.0
    %134 = vmatpush2.msra.mxu0 0.0
    %135 = vmatprep.subr.mxu0 0.0
    %136 = vmatpush2.msra.mxu0 0.0
    %137 = vmatprep.subr.mxu0 0.0
    %138 = vmatpush2.msra.mxu0 0.0
    %139 = vmatprep.mubr.f32.mxu0 0.0
    %140 = vmatmul.mubr.f32.gmra.mxu0 %v50
    %v141 = vpop.f32.mrf.mxu0
    %v142 = vadd.f32 %v73, %v141
    %v143 = vpop.f32.mrf.mxu0
    %144 = vmatprep.mubr.f32.mxu0 0.0
    %145 = vmatmul.mubr.f32.gmra.mxu0 %v51
    %v146 = vpop.f32.mrf.mxu0
    %v147 = vadd.f32 %v73, %v146
    %v148 = vpop.f32.mrf.mxu0
    %149 = vdwg.mxu0
    %v150 = vmax.f32 %v142, 0.0
    %v151 = vmax.f32 %v147, 0.0
    %v152 = vld [vmem:[#allocation2] sm:$0xff]
    %v153 = vld [vmem:[#allocation2 + $0x8] sm:$0xff]
    %v154 = vld [vmem:[#allocation2 + $0x10] sm:$0xff]
    %v155 = vld [vmem:[#allocation2 + $0x18] sm:$0xff]
    %v156 = vld [vmem:[#allocation2 + $0x20] sm:$0xff]
    %v157 = vld [vmem:[#allocation2 + $0x28] sm:$0xff]
    %v158 = vld [vmem:[#allocation2 + $0x30] sm:$0xff]
    %v159 = vld [vmem:[#allocation2 + $0x38] sm:$0xff]
    %v160 = vld [vmem:[#allocation2 + $0x40] sm:$0xff]
    %v161 = vld [vmem:[#allocation2 + $0x48] sm:$0xff]
    %v162 = vld [vmem:[#allocation2 + $0x50] sm:$0xff]
    %v163 = vld [vmem:[#allocation2 + $0x58] sm:$0xff]
    %v164 = vld [vmem:[#allocation2 + $0x60] sm:$0xff]
    %v165 = vld [vmem:[#allocation2 + $0x68] sm:$0xff]
    %v166 = vld [vmem:[#allocation2 + $0x70] sm:$0xff]
    %v167 = vld [vmem:[#allocation2 + $0x78] sm:$0xff]
    %v168 = vld [vmem:[#allocation2 + $0x80] sm:$0xff]
    %v169 = vld [vmem:[#allocation2 + $0x88] sm:$0xff]
    %v170 = vld [vmem:[#allocation2 + $0x90] sm:$0xff]
    %v171 = vld [vmem:[#allocation2 + $0x98] sm:$0xff]
    %v172 = vld [vmem:[#allocation2 + $0xa0] sm:$0xff]
    %v173 = vld [vmem:[#allocation2 + $0xa8] sm:$0xff]
    %v174 = vld [vmem:[#allocation2 + $0xb0] sm:$0xff]
    %v175 = vld [vmem:[#allocation2 + $0xb8] sm:$0xff]
    %v176 = vld [vmem:[#allocation2 + $0xc0] sm:$0xff]
    %v177 = vld [vmem:[#allocation2 + $0xc8] sm:$0xff]
    %v178 = vld [vmem:[#allocation2 + $0xd0] sm:$0xff]
    %v179 = vld [vmem:[#allocation2 + $0xd8] sm:$0xff]
    %v180 = vld [vmem:[#allocation2 + $0xe0] sm:$0xff]
    %v181 = vld [vmem:[#allocation2 + $0xe8] sm:$0xff]
    %v182 = vld [vmem:[#allocation2 + $0xf0] sm:$0xff]
    %v183 = vld [vmem:[#allocation2 + $0xf8] sm:$0xff]
    %v184 = vld [vmem:[#allocation2 + $0x100] sm:$0xff]
    %v185 = vld [vmem:[#allocation2 + $0x108] sm:$0xff]
    %v186 = vld [vmem:[#allocation2 + $0x110] sm:$0xff]
    %v187 = vld [vmem:[#allocation2 + $0x118] sm:$0xff]
    %v188 = vld [vmem:[#allocation2 + $0x120] sm:$0xff]
    %v189 = vld [vmem:[#allocation2 + $0x128] sm:$0xff]
    %v190 = vld [vmem:[#allocation2 + $0x130] sm:$0xff]
    %v191 = vld [vmem:[#allocation2 + $0x138] sm:$0xff]
    %v192 = vld [vmem:[#allocation2 + $0x140] sm:$0xff]
    %v193 = vld [vmem:[#allocation2 + $0x148] sm:$0xff]
    %v194 = vld [vmem:[#allocation2 + $0x150] sm:$0xff]
    %v195 = vld [vmem:[#allocation2 + $0x158] sm:$0xff]
    %v196 = vld [vmem:[#allocation2 + $0x160] sm:$0xff]
    %v197 = vld [vmem:[#allocation2 + $0x168] sm:$0xff]
    %v198 = vld [vmem:[#allocation2 + $0x170] sm:$0xff]
    %v199 = vld [vmem:[#allocation2 + $0x178] sm:$0xff]
    %v200 = vld [vmem:[#allocation2 + $0x180] sm:$0xff]
    %v201 = vld [vmem:[#allocation2 + $0x188] sm:$0xff]
    %v202 = vld [vmem:[#allocation2 + $0x190] sm:$0xff]
    %v203 = vld [vmem:[#allocation2 + $0x198] sm:$0xff]
    %v204 = vld [vmem:[#allocation2 + $0x1a0] sm:$0xff]
    %v205 = vld [vmem:[#allocation2 + $0x1a8] sm:$0xff]
    %v206 = vld [vmem:[#allocation2 + $0x1b0] sm:$0xff]
    %v207 = vld [vmem:[#allocation2 + $0x1b8] sm:$0xff]
    %v208 = vld [vmem:[#allocation2 + $0x1c0] sm:$0xff]
    %v209 = vld [vmem:[#allocation2 + $0x1c8] sm:$0xff]
    %v210 = vld [vmem:[#allocation2 + $0x1d0] sm:$0xff]
    %v211 = vld [vmem:[#allocation2 + $0x1d8] sm:$0xff]
    %v212 = vld [vmem:[#allocation2 + $0x1e0] sm:$0xff]
    %v213 = vld [vmem:[#allocation2 + $0x1e8] sm:$0xff]
    %v214 = vld [vmem:[#allocation2 + $0x1f0] sm:$0xff]
    %v215 = vld [vmem:[#allocation2 + $0x1f8] sm:$0xff]
    %v216 = vld [vmem:[%s6] sm:$0xff]
    %v218 = vlaneseq
    %v219 = vshrl.u32 %v218, 7
    %v220 = vsub.s32 0, %v219
    %v221 = vrot.slane %v216, %v220
    %v222 = vlaneseq
    %v223 = vshrl.u32 %v222, 7
    %v224 = vsub.s32 1, %v223
    %v225 = vrot.slane %v216, %v224
    %v226 = vlaneseq
    %v227 = vshrl.u32 %v226, 7
    %v228 = vsub.s32 2, %v227
    %v229 = vrot.slane %v216, %v228
    %v230 = vlaneseq
    %v231 = vshrl.u32 %v230, 7
    %v232 = vsub.s32 3, %v231
    %v233 = vrot.slane %v216, %v232
    %v234 = vlaneseq
    %v235 = vshrl.u32 %v234, 7
    %v236 = vsub.s32 4, %v235
    %v237 = vrot.slane %v216, %v236
    %v238 = vlaneseq
    %v239 = vshrl.u32 %v238, 7
    %v240 = vsub.s32 5, %v239
    %v241 = vrot.slane %v216, %v240
    %v242 = vlaneseq
    %v243 = vshrl.u32 %v242, 7
    %v244 = vsub.s32 6, %v243
    %v245 = vrot.slane %v216, %v244
    %v246 = vlaneseq
    %v247 = vshrl.u32 %v246, 7
    %v248 = vsub.s32 7, %v247
    %v249 = vrot.slane %v216, %v248
    %vm258 = vcmask 523264
    %v260 = vsel %vm258, %v150, 0
    %v263 = vsel %vm258, %v151, 0
    %265 = vmatprep.subr.mxu0 0.0
    %266 = vmatpush1.msra.mxu0 0.0
    %267 = vmatprep.subr.mxu0 0.0
    %268 = vmatpush1.msra.mxu0 0.0
    %269 = vmatprep.subr.mxu0 0.0
    %270 = vmatpush1.msra.mxu0 0.0
    %271 = vmatprep.subr.mxu0 0.0
    %272 = vmatpush1.msra.mxu0 0.0
    %273 = vmatprep.subr.mxu0 0.0
    %274 = vmatpush1.msra.mxu0 0.0
    %275 = vmatprep.subr.mxu0 0.0
    %276 = vmatpush1.msra.mxu0 0.0
    %277 = vmatprep.subr.mxu0 0.0
    %278 = vmatpush1.msra.mxu0 0.0
    %279 = vmatprep.subr.mxu0 0.0
    %280 = vmatpush1.msra.mxu0 0.0
    %281 = vmatprep.subr.mxu0 %v209
    %282 = vmatpush1.msra.mxu0 %v208
    %283 = vmatprep.subr.mxu0 %v201
    %284 = vmatpush1.msra.mxu0 %v200
    %285 = vmatprep.subr.mxu0 %v193
    %286 = vmatpush1.msra.mxu0 %v192
    %287 = vmatprep.subr.mxu0 %v185
    %288 = vmatpush1.msra.mxu0 %v184
    %289 = vmatprep.subr.mxu0 %v177
    %290 = vmatpush1.msra.mxu0 %v176
    %291 = vmatprep.subr.mxu0 %v169
    %292 = vmatpush1.msra.mxu0 %v168
    %293 = vmatprep.subr.mxu0 %v161
    %294 = vmatpush1.msra.mxu0 %v160
    %295 = vmatprep.subr.mxu0 %v153
    %296 = vmatpush1.msra.mxu0 %v152
    %297 = vmatprep.subr.mxu0 0.0
    %298 = vmatpush2.msra.mxu0 0.0
    %299 = vmatprep.subr.mxu0 0.0
    %300 = vmatpush2.msra.mxu0 0.0
    %301 = vmatprep.subr.mxu0 0.0
    %302 = vmatpush2.msra.mxu0 0.0
    %303 = vmatprep.subr.mxu0 0.0
    %304 = vmatpush2.msra.mxu0 0.0
    %305 = vmatprep.subr.mxu0 0.0
    %306 = vmatpush2.msra.mxu0 0.0
    %307 = vmatprep.subr.mxu0 0.0
    %308 = vmatpush2.msra.mxu0 0.0
    %309 = vmatprep.subr.mxu0 0.0
    %310 = vmatpush2.msra.mxu0 0.0
    %311 = vmatprep.subr.mxu0 0.0
    %312 = vmatpush2.msra.mxu0 0.0
    %313 = vmatprep.subr.mxu0 0.0
    %314 = vmatpush2.msra.mxu0 0.0
    %315 = vmatprep.subr.mxu0 0.0
    %316 = vmatpush2.msra.mxu0 0.0
    %317 = vmatprep.subr.mxu0 0.0
    %318 = vmatpush2.msra.mxu0 0.0
    %319 = vmatprep.subr.mxu0 0.0
    %320 = vmatpush2.msra.mxu0 0.0
    %321 = vmatprep.subr.mxu0 0.0
    %322 = vmatpush2.msra.mxu0 0.0
    %323 = vmatprep.subr.mxu0 0.0
    %324 = vmatpush2.msra.mxu0 0.0
    %325 = vmatprep.subr.mxu0 0.0
    %326 = vmatpush2.msra.mxu0 0.0
    %327 = vmatprep.subr.mxu0 0.0
    %328 = vmatpush2.msra.mxu0 0.0
    %329 = vmatprep.mubr.f32.mxu0 0.0
    %330 = vmatmul.mubr.f32.gmra.mxu0 %v260
    %v331 = vpop.f32.mrf.mxu0
    %v332 = vadd.f32 %v221, %v331
    %v333 = vpop.f32.mrf.mxu0
    %v334 = vadd.f32 %v225, %v333
    %335 = vmatprep.mubr.f32.mxu0 0.0
    %336 = vmatmul.mubr.f32.gmra.mxu0 %v263
    %v337 = vpop.f32.mrf.mxu0
    %v338 = vadd.f32 %v221, %v337
    %v339 = vpop.f32.mrf.mxu0
    %v340 = vadd.f32 %v225, %v339
    %341 = vdwg.mxu0
    %342 = vmatprep.subr.mxu0 0.0
    %343 = vmatpush1.msra.mxu0 0.0
    %344 = vmatprep.subr.mxu0 0.0
    %345 = vmatpush1.msra.mxu0 0.0
    %346 = vmatprep.subr.mxu0 0.0
    %347 = vmatpush1.msra.mxu0 0.0
    %348 = vmatprep.subr.mxu0 0.0
    %349 = vmatpush1.msra.mxu0 0.0
    %350 = vmatprep.subr.mxu0 0.0
    %351 = vmatpush1.msra.mxu0 0.0
    %352 = vmatprep.subr.mxu0 0.0
    %353 = vmatpush1.msra.mxu0 0.0
    %354 = vmatprep.subr.mxu0 0.0
    %355 = vmatpush1.msra.mxu0 0.0
    %356 = vmatprep.subr.mxu0 0.0
    %357 = vmatpush1.msra.mxu0 0.0
    %358 = vmatprep.subr.mxu0 %v211
    %359 = vmatpush1.msra.mxu0 %v210
    %360 = vmatprep.subr.mxu0 %v203
    %361 = vmatpush1.msra.mxu0 %v202
    %362 = vmatprep.subr.mxu0 %v195
    %363 = vmatpush1.msra.mxu0 %v194
    %364 = vmatprep.subr.mxu0 %v187
    %365 = vmatpush1.msra.mxu0 %v186
    %366 = vmatprep.subr.mxu0 %v179
    %367 = vmatpush1.msra.mxu0 %v178
    %368 = vmatprep.subr.mxu0 %v171
    %369 = vmatpush1.msra.mxu0 %v170
    %370 = vmatprep.subr.mxu0 %v163
    %371 = vmatpush1.msra.mxu0 %v162
    %372 = vmatprep.subr.mxu0 %v155
    %373 = vmatpush1.msra.mxu0 %v154
    %374 = vmatprep.subr.mxu0 0.0
    %375 = vmatpush2.msra.mxu0 0.0
    %376 = vmatprep.subr.mxu0 0.0
    %377 = vmatpush2.msra.mxu0 0.0
    %378 = vmatprep.subr.mxu0 0.0
    %379 = vmatpush2.msra.mxu0 0.0
    %380 = vmatprep.subr.mxu0 0.0
    %381 = vmatpush2.msra.mxu0 0.0
    %382 = vmatprep.subr.mxu0 0.0
    %383 = vmatpush2.msra.mxu0 0.0
    %384 = vmatprep.subr.mxu0 0.0
    %385 = vmatpush2.msra.mxu0 0.0
    %386 = vmatprep.subr.mxu0 0.0
    %387 = vmatpush2.msra.mxu0 0.0
    %388 = vmatprep.subr.mxu0 0.0
    %389 = vmatpush2.msra.mxu0 0.0
    %390 = vmatprep.subr.mxu0 0.0
    %391 = vmatpush2.msra.mxu0 0.0
    %392 = vmatprep.subr.mxu0 0.0
    %393 = vmatpush2.msra.mxu0 0.0
    %394 = vmatprep.subr.mxu0 0.0
    %395 = vmatpush2.msra.mxu0 0.0
    %396 = vmatprep.subr.mxu0 0.0
    %397 = vmatpush2.msra.mxu0 0.0
    %398 = vmatprep.subr.mxu0 0.0
    %399 = vmatpush2.msra.mxu0 0.0
    %400 = vmatprep.subr.mxu0 0.0
    %401 = vmatpush2.msra.mxu0 0.0
    %402 = vmatprep.subr.mxu0 0.0
    %403 = vmatpush2.msra.mxu0 0.0
    %404 = vmatprep.subr.mxu0 0.0
    %405 = vmatpush2.msra.mxu0 0.0
    %406 = vmatprep.mubr.f32.mxu0 0.0
    %407 = vmatmul.mubr.f32.gmra.mxu0 %v260
    %v408 = vpop.f32.mrf.mxu0
    %v409 = vadd.f32 %v229, %v408
    %v410 = vpop.f32.mrf.mxu0
    %v411 = vadd.f32 %v233, %v410
    %412 = vmatprep.mubr.f32.mxu0 0.0
    %413 = vmatmul.mubr.f32.gmra.mxu0 %v263
    %v414 = vpop.f32.mrf.mxu0
    %v415 = vadd.f32 %v229, %v414
    %v416 = vpop.f32.mrf.mxu0
    %v417 = vadd.f32 %v233, %v416
    %418 = vdwg.mxu0
    %419 = vmatprep.subr.mxu0 0.0
    %420 = vmatpush1.msra.mxu0 0.0
    %421 = vmatprep.subr.mxu0 0.0
    %422 = vmatpush1.msra.mxu0 0.0
    %423 = vmatprep.subr.mxu0 0.0
    %424 = vmatpush1.msra.mxu0 0.0
    %425 = vmatprep.subr.mxu0 0.0
    %426 = vmatpush1.msra.mxu0 0.0
    %427 = vmatprep.subr.mxu0 0.0
    %428 = vmatpush1.msra.mxu0 0.0
    %429 = vmatprep.subr.mxu0 0.0
    %430 = vmatpush1.msra.mxu0 0.0
    %431 = vmatprep.subr.mxu0 0.0
    %432 = vmatpush1.msra.mxu0 0.0
    %433 = vmatprep.subr.mxu0 0.0
    %434 = vmatpush1.msra.mxu0 0.0
    %435 = vmatprep.subr.mxu0 %v213
    %436 = vmatpush1.msra.mxu0 %v212
    %437 = vmatprep.subr.mxu0 %v205
    %438 = vmatpush1.msra.mxu0 %v204
    %439 = vmatprep.subr.mxu0 %v197
    %440 = vmatpush1.msra.mxu0 %v196
    %441 = vmatprep.subr.mxu0 %v189
    %442 = vmatpush1.msra.mxu0 %v188
    %443 = vmatprep.subr.mxu0 %v181
    %444 = vmatpush1.msra.mxu0 %v180
    %445 = vmatprep.subr.mxu0 %v173
    %446 = vmatpush1.msra.mxu0 %v172
    %447 = vmatprep.subr.mxu0 %v165
    %448 = vmatpush1.msra.mxu0 %v164
    %449 = vmatprep.subr.mxu0 %v157
    %450 = vmatpush1.msra.mxu0 %v156
    %451 = vmatprep.subr.mxu0 0.0
    %452 = vmatpush2.msra.mxu0 0.0
    %453 = vmatprep.subr.mxu0 0.0
    %454 = vmatpush2.msra.mxu0 0.0
    %455 = vmatprep.subr.mxu0 0.0
    %456 = vmatpush2.msra.mxu0 0.0
    %457 = vmatprep.subr.mxu0 0.0
    %458 = vmatpush2.msra.mxu0 0.0
    %459 = vmatprep.subr.mxu0 0.0
    %460 = vmatpush2.msra.mxu0 0.0
    %461 = vmatprep.subr.mxu0 0.0
    %462 = vmatpush2.msra.mxu0 0.0
    %463 = vmatprep.subr.mxu0 0.0
    %464 = vmatpush2.msra.mxu0 0.0
    %465 = vmatprep.subr.mxu0 0.0
    %466 = vmatpush2.msra.mxu0 0.0
    %467 = vmatprep.subr.mxu0 0.0
    %468 = vmatpush2.msra.mxu0 0.0
    %469 = vmatprep.subr.mxu0 0.0
    %470 = vmatpush2.msra.mxu0 0.0
    %471 = vmatprep.subr.mxu0 0.0
    %472 = vmatpush2.msra.mxu0 0.0
    %473 = vmatprep.subr.mxu0 0.0
    %474 = vmatpush2.msra.mxu0 0.0
    %475 = vmatprep.subr.mxu0 0.0
    %476 = vmatpush2.msra.mxu0 0.0
    %477 = vmatprep.subr.mxu0 0.0
    %478 = vmatpush2.msra.mxu0 0.0
    %479 = vmatprep.subr.mxu0 0.0
    %480 = vmatpush2.msra.mxu0 0.0
    %481 = vmatprep.subr.mxu0 0.0
    %482 = vmatpush2.msra.mxu0 0.0
    %483 = vmatprep.mubr.f32.mxu0 0.0
    %484 = vmatmul.mubr.f32.gmra.mxu0 %v260
    %v485 = vpop.f32.mrf.mxu0
    %v486 = vadd.f32 %v237, %v485
    %v487 = vpop.f32.mrf.mxu0
    %v488 = vadd.f32 %v241, %v487
    %489 = vmatprep.mubr.f32.mxu0 0.0
    %490 = vmatmul.mubr.f32.gmra.mxu0 %v263
    %v491 = vpop.f32.mrf.mxu0
    %v492 = vadd.f32 %v237, %v491
    %v493 = vpop.f32.mrf.mxu0
    %v494 = vadd.f32 %v241, %v493
    %495 = vdwg.mxu0
    %496 = vmatprep.subr.mxu0 0.0
    %497 = vmatpush1.msra.mxu0 0.0
    %498 = vmatprep.subr.mxu0 0.0
    %499 = vmatpush1.msra.mxu0 0.0
    %500 = vmatprep.subr.mxu0 0.0
    %501 = vmatpush1.msra.mxu0 0.0
    %502 = vmatprep.subr.mxu0 0.0
    %503 = vmatpush1.msra.mxu0 0.0
    %504 = vmatprep.subr.mxu0 0.0
    %505 = vmatpush1.msra.mxu0 0.0
    %506 = vmatprep.subr.mxu0 0.0
    %507 = vmatpush1.msra.mxu0 0.0
    %508 = vmatprep.subr.mxu0 0.0
    %509 = vmatpush1.msra.mxu0 0.0
    %510 = vmatprep.subr.mxu0 0.0
    %511 = vmatpush1.msra.mxu0 0.0
    %512 = vmatprep.subr.mxu0 %v215
    %513 = vmatpush1.msra.mxu0 %v214
    %514 = vmatprep.subr.mxu0 %v207
    %515 = vmatpush1.msra.mxu0 %v206
    %516 = vmatprep.subr.mxu0 %v199
    %517 = vmatpush1.msra.mxu0 %v198
    %518 = vmatprep.subr.mxu0 %v191
    %519 = vmatpush1.msra.mxu0 %v190
    %520 = vmatprep.subr.mxu0 %v183
    %521 = vmatpush1.msra.mxu0 %v182
    %522 = vmatprep.subr.mxu0 %v175
    %523 = vmatpush1.msra.mxu0 %v174
    %524 = vmatprep.subr.mxu0 %v167
    %525 = vmatpush1.msra.mxu0 %v166
    %526 = vmatprep.subr.mxu0 %v159
    %527 = vmatpush1.msra.mxu0 %v158
    %528 = vmatprep.subr.mxu0 0.0
    %529 = vmatpush2.msra.mxu0 0.0
    %530 = vmatprep.subr.mxu0 0.0
    %531 = vmatpush2.msra.mxu0 0.0
    %532 = vmatprep.subr.mxu0 0.0
    %533 = vmatpush2.msra.mxu0 0.0
    %534 = vmatprep.subr.mxu0 0.0
    %535 = vmatpush2.msra.mxu0 0.0
    %536 = vmatprep.subr.mxu0 0.0
    %537 = vmatpush2.msra.mxu0 0.0
    %538 = vmatprep.subr.mxu0 0.0
    %539 = vmatpush2.msra.mxu0 0.0
    %540 = vmatprep.subr.mxu0 0.0
    %541 = vmatpush2.msra.mxu0 0.0
    %542 = vmatprep.subr.mxu0 0.0
    %543 = vmatpush2.msra.mxu0 0.0
    %544 = vmatprep.subr.mxu0 0.0
    %545 = vmatpush2.msra.mxu0 0.0
    %546 = vmatprep.subr.mxu0 0.0
    %547 = vmatpush2.msra.mxu0 0.0
    %548 = vmatprep.subr.mxu0 0.0
    %549 = vmatpush2.msra.mxu0 0.0
    %550 = vmatprep.subr.mxu0 0.0
    %551 = vmatpush2.msra.mxu0 0.0
    %552 = vmatprep.subr.mxu0 0.0
    %553 = vmatpush2.msra.mxu0 0.0
    %554 = vmatprep.subr.mxu0 0.0
    %555 = vmatpush2.msra.mxu0 0.0
    %556 = vmatprep.subr.mxu0 0.0
    %557 = vmatpush2.msra.mxu0 0.0
    %558 = vmatprep.subr.mxu0 0.0
    %559 = vmatpush2.msra.mxu0 0.0
    %560 = vmatprep.mubr.f32.mxu0 0.0
    %561 = vmatmul.mubr.f32.gmra.mxu0 %v260
    %v562 = vpop.f32.mrf.mxu0
    %v563 = vadd.f32 %v245, %v562
    %v564 = vpop.f32.mrf.mxu0
    %v565 = vadd.f32 %v249, %v564
    %566 = vmatprep.mubr.f32.mxu0 0.0
    %567 = vmatmul.mubr.f32.gmra.mxu0 %v263
    %v568 = vpop.f32.mrf.mxu0
    %v569 = vadd.f32 %v245, %v568
    %v570 = vpop.f32.mrf.mxu0
    %v571 = vadd.f32 %v249, %v570
    %572 = vdwg.mxu0
    %573 = vst [vmem:[#allocation5] sm:$0xff] %v332
    %574 = vst [vmem:[#allocation5 + $0x8] sm:$0xff] %v334
    %575 = vst [vmem:[#allocation5 + $0x10] sm:$0xff] %v409
    %576 = vst [vmem:[#allocation5 + $0x18] sm:$0xff] %v411
    %577 = vst [vmem:[#allocation5 + $0x20] sm:$0xff] %v486
    %578 = vst [vmem:[#allocation5 + $0x28] sm:$0xff] %v488
    %579 = vst [vmem:[#allocation5 + $0x30] sm:$0xff] %v563
    %580 = vst [vmem:[#allocation5 + $0x38] sm:$0xff] %v565
    %581 = vst [vmem:[#allocation5 + $0x40] sm:$0xff] %v338
    %582 = vst [vmem:[#allocation5 + $0x48] sm:$0xff] %v340
    %583 = vst [vmem:[#allocation5 + $0x50] sm:$0xff] %v415
    %584 = vst [vmem:[#allocation5 + $0x58] sm:$0xff] %v417
    %585 = vst [vmem:[#allocation5 + $0x60] sm:$0xff] %v492
    %586 = vst [vmem:[#allocation5 + $0x68] sm:$0xff] %v494
    %587 = vst [vmem:[#allocation5 + $0x70] sm:$0xff] %v569
    %588 = vst [vmem:[#allocation5 + $0x78] sm:$0xff] %v571
    %v589 = vld [vmem:[%s3] sm:$0xff]
    %v590 = vld [vmem:[%s3 + $0x8] sm:$0xff]
    %v591 = vld [vmem:[%s3 + $0x10] sm:$0xff]
    %v592 = vld [vmem:[%s3 + $0x18] sm:$0xff]
    %v593 = vld [vmem:[%s3 + $0x20] sm:$0xff]
    %v594 = vld [vmem:[%s3 + $0x28] sm:$0xff]
    %v595 = vld [vmem:[%s3 + $0x30] sm:$0xff]
    %v596 = vld [vmem:[%s3 + $0x38] sm:$0xff]
    %v597 = vld [vmem:[%s4] sm:$0x1]
    %v599 = vlaneseq
    %v600 = vshrl.u32 %v599, 7
    %v601 = vsub.s32 0, %v600
    %v602 = vrot.slane %v597, %v601
    %604 = vmatprep.subr.mxu0 0.0
    %605 = vmatpush1.msra.mxu0 0.0
    %606 = vmatprep.subr.mxu0 0.0
    %607 = vmatpush1.msra.mxu0 0.0
    %608 = vmatprep.subr.mxu0 0.0
    %609 = vmatpush1.msra.mxu0 0.0
    %610 = vmatprep.subr.mxu0 0.0
    %611 = vmatpush1.msra.mxu0 0.0
    %612 = vmatprep.subr.mxu0 0.0
    %613 = vmatpush1.msra.mxu0 0.0
    %614 = vmatprep.subr.mxu0 0.0
    %615 = vmatpush1.msra.mxu0 0.0
    %616 = vmatprep.subr.mxu0 0.0
    %617 = vmatpush1.msra.mxu0 0.0
    %618 = vmatprep.subr.mxu0 0.0
    %619 = vmatpush1.msra.mxu0 0.0
    %620 = vmatprep.subr.mxu0 0.0
    %621 = vmatpush1.msra.mxu0 %v596
    %622 = vmatprep.subr.mxu0 0.0
    %623 = vmatpush1.msra.mxu0 %v595
    %624 = vmatprep.subr.mxu0 0.0
    %625 = vmatpush1.msra.mxu0 %v594
    %626 = vmatprep.subr.mxu0 0.0
    %627 = vmatpush1.msra.mxu0 %v593
    %628 = vmatprep.subr.mxu0 0.0
    %629 = vmatpush1.msra.mxu0 %v592
    %630 = vmatprep.subr.mxu0 0.0
    %631 = vmatpush1.msra.mxu0 %v591
    %632 = vmatprep.subr.mxu0 0.0
    %633 = vmatpush1.msra.mxu0 %v590
    %634 = vmatprep.subr.mxu0 0.0
    %635 = vmatpush1.msra.mxu0 %v589
    %636 = vmatprep.subr.mxu0 0.0
    %637 = vmatpush2.msra.mxu0 0.0
    %638 = vmatprep.subr.mxu0 0.0
    %639 = vmatpush2.msra.mxu0 0.0
    %640 = vmatprep.subr.mxu0 0.0
    %641 = vmatpush2.msra.mxu0 0.0
    %642 = vmatprep.subr.mxu0 0.0
    %643 = vmatpush2.msra.mxu0 0.0
    %644 = vmatprep.subr.mxu0 0.0
    %645 = vmatpush2.msra.mxu0 0.0
    %646 = vmatprep.subr.mxu0 0.0
    %647 = vmatpush2.msra.mxu0 0.0
    %648 = vmatprep.subr.mxu0 0.0
    %649 = vmatpush2.msra.mxu0 0.0
    %650 = vmatprep.subr.mxu0 0.0
    %651 = vmatpush2.msra.mxu0 0.0
    %652 = vmatprep.subr.mxu0 0.0
    %653 = vmatpush2.msra.mxu0 0.0
    %654 = vmatprep.subr.mxu0 0.0
    %655 = vmatpush2.msra.mxu0 0.0
    %656 = vmatprep.subr.mxu0 0.0
    %657 = vmatpush2.msra.mxu0 0.0
    %658 = vmatprep.subr.mxu0 0.0
    %659 = vmatpush2.msra.mxu0 0.0
    %660 = vmatprep.subr.mxu0 0.0
    %661 = vmatpush2.msra.mxu0 0.0
    %662 = vmatprep.subr.mxu0 0.0
    %663 = vmatpush2.msra.mxu0 0.0
    %664 = vmatprep.subr.mxu0 0.0
    %665 = vmatpush2.msra.mxu0 0.0
    %666 = vmatprep.subr.mxu0 0.0
    %667 = vmatpush2.msra.mxu0 0.0
    %668 = vmatprep.mubr.f32.mxu0 0.0
    %669 = vmatmul.mubr.f32.gmra.mxu0 %v260
    %v670 = vpop.f32.mrf.mxu0
    %v671 = vadd.f32 %v602, %v670
    %v672 = vpop.f32.mrf.mxu0
    %673 = vmatprep.mubr.f32.mxu0 0.0
    %674 = vmatmul.mubr.f32.gmra.mxu0 %v263
    %v675 = vpop.f32.mrf.mxu0
    %v676 = vadd.f32 %v602, %v675
    %v677 = vpop.f32.mrf.mxu0
    %678 = vdwg.mxu0
    %v679 = vmax.f32 %v671, 0.0
    %v680 = vmax.f32 %v676, 0.0
    %v681 = vld [vmem:[%s7] sm:$0xff]
    %v682 = vld [vmem:[%s7 + $0x8] sm:$0xff]
    %v683 = vld [vmem:[%s7 + $0x10] sm:$0xff]
    %v684 = vld [vmem:[%s7 + $0x18] sm:$0xff]
    %v685 = vld [vmem:[%s7 + $0x20] sm:$0xff]
    %v686 = vld [vmem:[%s7 + $0x28] sm:$0xff]
    %v687 = vld [vmem:[%s7 + $0x30] sm:$0xff]
    %v688 = vld [vmem:[%s7 + $0x38] sm:$0xff]
    %v689 = vld [vmem:[%s8] sm:$0x1]
    %v691 = vlaneseq
    %v692 = vshrl.u32 %v691, 7
    %v693 = vsub.s32 0, %v692
    %v694 = vrot.slane %v689, %v693
    %v697 = vsel %vm258, %v679, 0
    %v700 = vsel %vm258, %v680, 0
    %702 = vmatprep.subr.mxu0 0.0
    %703 = vmatpush1.msra.mxu0 0.0
    %704 = vmatprep.subr.mxu0 0.0
    %705 = vmatpush1.msra.mxu0 0.0
    %706 = vmatprep.subr.mxu0 0.0
    %707 = vmatpush1.msra.mxu0 0.0
    %708 = vmatprep.subr.mxu0 0.0
    %709 = vmatpush1.msra.mxu0 0.0
    %710 = vmatprep.subr.mxu0 0.0
    %711 = vmatpush1.msra.mxu0 0.0
    %712 = vmatprep.subr.mxu0 0.0
    %713 = vmatpush1.msra.mxu0 0.0
    %714 = vmatprep.subr.mxu0 0.0
    %715 = vmatpush1.msra.mxu0 0.0
    %716 = vmatprep.subr.mxu0 0.0
    %717 = vmatpush1.msra.mxu0 0.0
    %718 = vmatprep.subr.mxu0 0.0
    %719 = vmatpush1.msra.mxu0 %v688
    %720 = vmatprep.subr.mxu0 0.0
    %721 = vmatpush1.msra.mxu0 %v687
    %722 = vmatprep.subr.mxu0 0.0
    %723 = vmatpush1.msra.mxu0 %v686
    %724 = vmatprep.subr.mxu0 0.0
    %725 = vmatpush1.msra.mxu0 %v685
    %726 = vmatprep.subr.mxu0 0.0
    %727 = vmatpush1.msra.mxu0 %v684
    %728 = vmatprep.subr.mxu0 0.0
    %729 = vmatpush1.msra.mxu0 %v683
    %730 = vmatprep.subr.mxu0 0.0
    %731 = vmatpush1.msra.mxu0 %v682
    %732 = vmatprep.subr.mxu0 0.0
    %733 = vmatpush1.msra.mxu0 %v681
    %734 = vmatprep.subr.mxu0 0.0
    %735 = vmatpush2.msra.mxu0 0.0
    %736 = vmatprep.subr.mxu0 0.0
    %737 = vmatpush2.msra.mxu0 0.0
    %738 = vmatprep.subr.mxu0 0.0
    %739 = vmatpush2.msra.mxu0 0.0
    %740 = vmatprep.subr.mxu0 0.0
    %741 = vmatpush2.msra.mxu0 0.0
    %742 = vmatprep.subr.mxu0 0.0
    %743 = vmatpush2.msra.mxu0 0.0
    %744 = vmatprep.subr.mxu0 0.0
    %745 = vmatpush2.msra.mxu0 0.0
    %746 = vmatprep.subr.mxu0 0.0
    %747 = vmatpush2.msra.mxu0 0.0
    %748 = vmatprep.subr.mxu0 0.0
    %749 = vmatpush2.msra.mxu0 0.0
    %750 = vmatprep.subr.mxu0 0.0
    %751 = vmatpush2.msra.mxu0 0.0
    %752 = vmatprep.subr.mxu0 0.0
    %753 = vmatpush2.msra.mxu0 0.0
    %754 = vmatprep.subr.mxu0 0.0
    %755 = vmatpush2.msra.mxu0 0.0
    %756 = vmatprep.subr.mxu0 0.0
    %757 = vmatpush2.msra.mxu0 0.0
    %758 = vmatprep.subr.mxu0 0.0
    %759 = vmatpush2.msra.mxu0 0.0
    %760 = vmatprep.subr.mxu0 0.0
    %761 = vmatpush2.msra.mxu0 0.0
    %762 = vmatprep.subr.mxu0 0.0
    %763 = vmatpush2.msra.mxu0 0.0
    %764 = vmatprep.subr.mxu0 0.0
    %765 = vmatpush2.msra.mxu0 0.0
    %766 = vmatprep.mubr.f32.mxu0 0.0
    %767 = vmatmul.mubr.f32.gmra.mxu0 %v697
    %v768 = vpop.f32.mrf.mxu0
    %v769 = vadd.f32 %v694, %v768
    %v770 = vpop.f32.mrf.mxu0
    %771 = vmatprep.mubr.f32.mxu0 0.0
    %772 = vmatmul.mubr.f32.gmra.mxu0 %v700
    %v773 = vpop.f32.mrf.mxu0
    %v774 = vadd.f32 %v694, %v773
    %v775 = vpop.f32.mrf.mxu0
    %776 = vdwg.mxu0
    %v777 = vsub.f32 0.0, %v769
    %v778 = vsub.f32 0.0, %v774
    %v779 = vmul.f32 %v777, 1.442695
    %v780 = vpow.pop %v779
    %v781 = vmul.f32 %v778, 1.442695
    %v782 = vpow.pop %v781
    %v783 = vadd.f32 %v780, 1.0
    %v784 = vadd.f32 %v782, 1.0
    %v785 = vrcp.pop %v783
    %v786 = vmul.f32 1.0, %v785
    %v787 = vrcp.pop %v784
    %v788 = vmul.f32 1.0, %v787
    %789 = vst [vmem:[#allocation6] sm:$0xff] %v786
    %790 = vst [vmem:[#allocation6 + $0x8] sm:$0xff] %v788
    // Predicated region
    $region42: #{tpu_custom_call.1} parent=1 // pred_check
      _
    $region43: #{tpu_custom_call.1} parent=1 // pred_check_branch
      %792 = sbr.rel (0) target = $region45
    $region44: #{tpu_custom_call.1} parent=1 // pred_region
      %s794 = ssub.s32 2048, 2048
      %795 = vsyncadd [#allocation4], %s794
      %s796 = sshll.u32 [#allocation5], 4
      %s797 = int_to_ptr.vmem [resolvable:$true] %s796
      %802 = dma.vmem_to_hbm [thread:$0]  %s797, 2048, %s9, [#allocation4], 1024, 1024, 64
    $region45: #{tpu_custom_call.1} parent=1 // pred_fallthru
      _
    // Predicated region
    $region46: #{tpu_custom_call.1} parent=1 // pred_check
      _
    $region47: #{tpu_custom_call.1} parent=1 // pred_check_branch
      %804 = sbr.rel (0) target = $region49
    $region48: #{tpu_custom_call.1} parent=1 // pred_region
      %s806 = ssub.s32 256, 256
      %807 = vsyncadd [#allocation7], %s806
      %s808 = sshll.u32 [#allocation6], 4
      %s809 = int_to_ptr.vmem [resolvable:$true] %s808
      %814 = dma.vmem_to_hbm [thread:$0]  %s809, 256, %s10, [#allocation7], 128, 128, 8
    $region49: #{tpu_custom_call.1} parent=1 // pred_fallthru
      _
    // Predicated region
    $region50: #{tpu_custom_call.1} parent=1 // pred_check
      _
    $region51: #{tpu_custom_call.1} parent=1 // pred_check_branch
      %816 = sbr.rel (0) target = $region53
    $region52: #{tpu_custom_call.1} parent=1 // pred_region
      %817 = dma.done [#allocation4], 2048
    $region53: #{tpu_custom_call.1} parent=1 // pred_fallthru
      _
    // Predicated region
    $region54: #{tpu_custom_call.1} parent=1 // pred_check
      _
    $region55: #{tpu_custom_call.1} parent=1 // pred_check_branch
      %819 = sbr.rel (0) target = $region57
    $region56: #{tpu_custom_call.1} parent=1 // pred_region
      %820 = dma.done [#allocation7], 256
    $region57: #{tpu_custom_call.1} parent=1 // pred_fallthru
      _
    %821 = vsyncpa [#allocation3], 1
    %822 = vsyncpa [#allocation4], 1
    %823 = vsyncpa [#allocation7], 1

</llo_original>
